<compile_context>
chip_gen: v5e
topology: v5e:2x2
jax: 0.10.0
libtpu: 0.0.40
codegen_flags: <defaults>
</compile_context>

<pallas_src>
import jax
import jax.numpy as jnp
from jax.experimental import pallas as pl
from jax.experimental.pallas import tpu as pltpu


_BLOCK_CAP_BYTES = 4 * 1024 * 1024   # per-block cap; 2 arrays x 2 bufs -> <=16 MiB VMEM
_MAX_LANE = 2048                      # target lane width (multiple of 128)


def _normalize_kernel(scale_ref, bias_ref, x_ref, o_ref):
    """o = x * scale[c] + bias[c], with scale = 1/sd and bias = -mean/sd (f32)."""
    c = pl.program_id(0)
    scale = scale_ref[c]              # f32 scalar from SMEM
    bias = bias_ref[c]
    x = x_ref[...].astype(jnp.float32)
    o_ref[...] = (x * scale + bias).astype(o_ref.dtype)


def _choose_lane(hw: int) -> int:
    """Largest multiple of 128 that divides hw (capped at _MAX_LANE), else full extent."""
    if hw % 128 != 0:
        return hw                     # full-extent last dim is always a legal block dim
    q = hw // 128
    for d in range(min(q, _MAX_LANE // 128), 0, -1):
        if q % d == 0:
            return 128 * d
    return 128


def _choose_batch_block(batch: int, plane_bytes: int) -> int:
    """Largest divisor of `batch` whose block stays under the VMEM block cap."""
    best = 1
    for d in range(1, batch + 1):
        if batch % d == 0 and d * plane_bytes <= _BLOCK_CAP_BYTES:
            best = d
    return best


def normalize_layer(x: jax.Array, means: jax.Array, sds: jax.Array) -> jax.Array:
    """(x - means[c]) / sds[c] broadcast over N, H, W.  x is NCHW."""
    B, C, H, W = x.shape
    hw = H * W
    lane = _choose_lane(hw)
    rows = hw // lane

    itemsize = jnp.dtype(x.dtype).itemsize
    plane_bytes = rows * lane * itemsize          # one (rows, lane) slab per (b, c)
    b_blk = _choose_batch_block(B, plane_bytes)

    # Lane-dense view: trailing-dim reshape only, no data movement.
    x4 = x.reshape(B, C, rows, lane)

    # Per-channel constants stay float32 in SMEM; only the output is cast to x.dtype.
    scale = 1.0 / sds.astype(jnp.float32)
    bias = (-means.astype(jnp.float32)) * scale
    # NOTE: sds == 0 yields inf/nan, matching the PyTorch module's semantics.

    block = (b_blk, 1, rows, lane)
    grid = (C, B // b_blk)

    cost = pl.CostEstimate(
        flops=2 * x.size,                         # one fused mul-add per element
        transcendentals=0,
        bytes_accessed=2 * x.size * itemsize + 2 * C * 4,
    )

    out = pl.pallas_call(
        _normalize_kernel,
        out_shape=jax.ShapeDtypeStruct((B, C, rows, lane), x.dtype),
        grid_spec=pltpu.PrefetchScalarGridSpec(
            num_scalar_prefetch=2,                # scale, bias -> SMEM
            grid=grid,
            in_specs=[
                pl.BlockSpec(block, lambda c, b, scale_ref, bias_ref: (b, c, 0, 0)),
            ],
            out_specs=pl.BlockSpec(block, lambda c, b, scale_ref, bias_ref: (b, c, 0, 0)),
        ),
        compiler_params=pltpu.CompilerParams(
            dimension_semantics=("parallel", "parallel"),
            vmem_limit_bytes=32 * 1024 * 1024,
        ),
        cost_estimate=cost,
    )(scale, bias, x4)

    return out.reshape(B, C, H, W)


if __name__ == "__main__":
    key = jax.random.PRNGKey(0)
    B, C, H, W = 2, 4, 16, 16

    # Deterministic "dataset" channel means / sds (module __init__ args).
    means = jnp.array([0.485, 0.456, 0.406, 0.5], dtype=jnp.float32)[:C]
    sds = jnp.array([0.229, 0.224, 0.225, 0.25], dtype=jnp.float32)[:C]

    x = jax.random.uniform(key, (B, C, H, W), dtype=jnp.float32)

    out = normalize_layer(x, means, sds)
    out = jax.block_until_ready(out)

    # Reference check against plain JAX broadcasting semantics.
    ref = (x - means[None, :, None, None]) / sds[None, :, None, None]
    assert out.shape == (B, C, H, W)
    assert jnp.allclose(out, ref, atol=1e-5, rtol=1e-5)

    print("KERNEL_OK")
</pallas_src>

<mosaic_0001>
module attributes {stable_mosaic.version = 11 : i64} {
  func.func @_normalize_kernel(%arg0: i32, %arg1: i32, %arg2: memref<4xf32, #tpu.memory_space<smem>>, %arg3: memref<4xf32, #tpu.memory_space<smem>>, %arg4: memref<2x1x1x256xf32, #tpu.memory_space<vmem>>, %arg5: memref<2x1x1x256xf32, #tpu.memory_space<vmem>>) attributes {dimension_semantics = [#tpu.dimension_semantics<parallel>, #tpu.dimension_semantics<parallel>], iteration_bounds = array<i64: 4, 1>, scalar_prefetch = 2 : i64, scratch_operands = 0 : i64, tpu.core_type = #tpu.core_type<tc>, window_params = [{transform_indices = @transform_0, window_bounds = array<i64: 2, 1, 1, 256>}, {transform_indices = @transform_1, window_bounds = array<i64: 2, 1, 1, 256>}]} {
    %0 = arith.index_cast %arg0 : i32 to index
    %1 = memref.load %arg2[%0] : memref<4xf32, #tpu.memory_space<smem>>
    %2 = arith.index_cast %arg0 : i32 to index
    %3 = memref.load %arg3[%2] : memref<4xf32, #tpu.memory_space<smem>>
    %c0 = arith.constant 0 : index
    %c0_0 = arith.constant 0 : index
    %c0_1 = arith.constant 0 : index
    %c0_2 = arith.constant 0 : index
    %4 = vector.load %arg4[%c0, %c0_0, %c0_1, %c0_2] : memref<2x1x1x256xf32, #tpu.memory_space<vmem>>, vector<2x1x1x256xf32>
    %5 = vector.broadcast %1 : f32 to vector<2x1x1x256xf32>
    %6 = arith.mulf %4, %5 : vector<2x1x1x256xf32>
    %7 = vector.broadcast %3 : f32 to vector<2x1x1x256xf32>
    %8 = arith.addf %6, %7 : vector<2x1x1x256xf32>
    %c0_3 = arith.constant 0 : index
    %c0_4 = arith.constant 0 : index
    %c0_5 = arith.constant 0 : index
    %c0_6 = arith.constant 0 : index
    %9 = vector.load %arg5[%c0_3, %c0_4, %c0_5, %c0_6] : memref<2x1x1x256xf32, #tpu.memory_space<vmem>>, vector<2x1x1x256xf32>
    tpu.vector_store %arg5[%c0_3, %c0_4, %c0_5, %c0_6], %8 {strides = array<i32>} : memref<2x1x1x256xf32, #tpu.memory_space<vmem>>, vector<2x1x1x256xf32>,
    return
  }
  func.func @transform_0(%arg0: i32, %arg1: i32, %arg2: memref<4xf32, #tpu.memory_space<smem>>, %arg3: memref<4xf32, #tpu.memory_space<smem>>) -> (i32, i32, i32, i32) {
    %c0_i32 = arith.constant 0 : i32
    %c0_i32_0 = arith.constant 0 : i32
    %c0_i32_1 = arith.constant 0 : i32
    return %arg1, %arg0, %c0_i32, %c0_i32_0 : i32, i32, i32, i32
  }
  func.func @transform_1(%arg0: i32, %arg1: i32, %arg2: memref<4xf32, #tpu.memory_space<smem>>, %arg3: memref<4xf32, #tpu.memory_space<smem>>) -> (i32, i32, i32, i32) {
    %c0_i32 = arith.constant 0 : i32
    %c0_i32_0 = arith.constant 0 : i32
    %c0_i32_1 = arith.constant 0 : i32
    return %arg1, %arg0, %c0_i32, %c0_i32_0 : i32, i32, i32, i32
  }
}

</mosaic_0001>

<llo_original>
// kernel: tpu_custom_call.1
$region0: #{tpu_custom_call.1}
  #allocation0 [shape = 'u32[]', space=smem, size = 0x4, offset = 0x4, fixed_abs, tag = 'smem constant byte address 0x4 - core index']
  #allocation1 [shape = 'u32[72,128]{1,0:T(1,128)}', space=vmem, size = 0x9000, scoped, tag = 'internal scratch']
  #allocation2 [shape = 's32[1]{0}', space=sflag, size = 0x4, scoped, tag = 'scoped memory for tpu_custom_call.1']
  #allocation3 [shape = 'u8[512]{0}', space=smem, size = 0x200, scoped, tag = 'prefetched SMEM operand 0']
  #allocation4 [shape = 'u8[512]{0}', space=smem, size = 0x200, scoped, tag = 'prefetched SMEM operand 1']
  %s0 = inlined_call_operand.hbm [shape: f32[4], index: 0, kind: input, shape index: {}]
  %s1 = inlined_call_operand.hbm [shape: f32[4], index: 1, kind: input, shape index: {}]
  %s2 = inlined_call_operand.hbm [shape: f32[2,4,1,256], index: 2, kind: input, shape index: {}]
  %s3 = inlined_call_operand.hbm [shape: f32[2,4,1,256], index: 3, kind: output, shape index: {}]
  %s4 = sld [smem:[#allocation0]]
  $region41: #{tpu_custom_call.1} parent=0
    _
  %s6 = ssub.s32 1, %s4
  %s7 = scalar_select 0, %s6, %s4
  %s9 = sshll.u32 %s0, 4
  %s10 = int_to_ptr.hbm [resolvable:$true] %s9
  %12 = dma.hbm_to_smem %s10, 16, [#allocation3], [#allocation2]
  %s14 = sshll.u32 %s1, 4
  %s15 = int_to_ptr.hbm [resolvable:$true] %s14
  %17 = dma.hbm_to_smem %s15, 16, [#allocation4], [#allocation2]
  %19 = dma.done [#allocation2], 32
  %20 = sfence
  $region1: #{tpu_custom_call.1} parent=0
    #allocation5 [shape = 'u8[4096]{0}', space=vmem, size = 0x1000, scoped, tag = 'input window, operand 2']
    #allocation6 [shape = 's32[2]{0}', space=sflag, size = 0x8, scoped, tag = 'scoped memory for tpu_custom_call.1']
    #allocation7 [shape = 's32[2]{0}', space=sflag, size = 0x8, scoped, tag = 'scoped memory for tpu_custom_call.1']
    #allocation8 [shape = 'u8[4096]{0}', space=vmem, size = 0x1000, scoped, tag = 'output window, operand 0']
    %21 = vsyncpa [#allocation6], 0
    %s22 = scalar_lea.sflag [#allocation6], 1
    %23 = vsyncpa %s22, 0
    %24 = vsyncpa [#allocation7], 0
    %s25 = scalar_lea.sflag [#allocation7], 1
    %26 = vsyncpa %s25, 0
    loop: start=0, step=1, limit=6
    $region2: #{tpu_custom_call.1} parent=1 // loop_pre_header
      _
    $region3: #{tpu_custom_call.1} parent=1 // loop_header
      %s28 = sphi 0, %s32
      %p29 = scmp.ge.s32.totalorder %s28, 6
      %s35 = sphi 0, %s47
      %s36 = sphi 0, %s43
      %s37 = sphi 0, %s35
      %s38 = sphi 0, %s36
      %s39 = sphi 0, %s37
      %s40 = sphi 0, %s38
      %s52 = sphi 0, %s54
      %s55 = sphi 0, %s52
      %s56 = sphi 0, %s55
      %s72 = sphi 0, %s56
      %s80 = sphi 0, %s82
      %s83 = sphi 0, %s80
      %s84 = sphi 0, %s83
      %s100 = sphi 0, %s84
    $region4: #{tpu_custom_call.1} parent=1 // loop_header_branch
      %31 = sbr.rel (%p29) target = $region8
    $region5: #{tpu_custom_call.1} parent=1 // loop_body
      %s33 = ssub.s32 %s28, 1
      %s34 = ssub.s32 %s28, 2
      %s41 = sadd.s32 1, %s36
      %p42 = scmp.ge.s32.totalorder %s41, 1
      %s43 = scalar_select %p42, 0, %s41
      %s44 = sadd.s32 1, %s35
      %s45 = scalar_select %p42, %s44, %s35
      %p46 = scmp.ge.s32.totalorder %s45, 4
      %s47 = scalar_select %p46, 0, %s45
      %s48 = ssub.s32 %s36, %s43
      %s49 = ssub.s32 %s35, %s47
      %s50 = sor.u32 %s48, %s49
      %p51 = scmp.eq.s32.totalorder %s50, 0
      %s53 = sadd.s32 %s52, 1
      %s54 = scalar_select %p51, %s52, %s53
      %p57 = pneg %p51
      %p58 = scmp.eq.s32.totalorder %s28, 3
      %p59 = por %p57, %p58
      %p60 = scmp.ne.s32.totalorder %s52, %s55
      %p61 = scmp.eq.s32.totalorder %s28, 0
      %p62 = por %p60, %p61
      %p63 = scmp.ne.s32.totalorder %s52, %s55
      %p64 = scmp.eq.s32.totalorder %s33, 3
      %p65 = por %p63, %p64
      %p66 = scmp.ne.s32.totalorder %s55, %s56
      %p67 = scmp.eq.s32.totalorder %s33, 0
      %p68 = por %p66, %p67
      %p69 = scmp.ne.s32.totalorder %s55, %s56
      %p70 = scmp.eq.s32.totalorder %s34, 3
      %p71 = por %p69, %p70
      %p73 = scmp.ne.s32.totalorder %s56, %s72
      %p74 = scmp.eq.s32.totalorder %s34, 0
      %p75 = por %p73, %p74
      %s76 = ssub.s32 %s36, %s43
      %s77 = ssub.s32 %s35, %s47
      %s78 = sor.u32 %s76, %s77
      %p79 = scmp.eq.s32.totalorder %s78, 0
      %s81 = sadd.s32 %s80, 1
      %s82 = scalar_select %p79, %s80, %s81
      %p85 = pneg %p79
      %p86 = scmp.eq.s32.totalorder %s28, 3
      %p87 = por %p85, %p86
      %p88 = scmp.ne.s32.totalorder %s80, %s83
      %p89 = scmp.eq.s32.totalorder %s28, 0
      %p90 = por %p88, %p89
      %p91 = scmp.ne.s32.totalorder %s80, %s83
      %p92 = scmp.eq.s32.totalorder %s33, 3
      %p93 = por %p91, %p92
      %p94 = scmp.ne.s32.totalorder %s83, %s84
      %p95 = scmp.eq.s32.totalorder %s33, 0
      %p96 = por %p94, %p95
      %p97 = scmp.ne.s32.totalorder %s83, %s84
      %p98 = scmp.eq.s32.totalorder %s34, 3
      %p99 = por %p97, %p98
      %p101 = scmp.ne.s32.totalorder %s84, %s100
      %p102 = scmp.eq.s32.totalorder %s34, 0
      %p103 = por %p101, %p102
      %p104 = scmp.le.s32.totalorder 1, %s28
      %p105 = scmp.lt.s32.totalorder %s28, 5
      %p106 = pnand %p104, %p105
      %p107 = pneg %p106
      // Predicated region
      $region9: #{tpu_custom_call.1} parent=5 // pred_check
        _
      $region10: #{tpu_custom_call.1} parent=5 // pred_check_branch
        %109 = sbr.rel (%p106) target = $region12
      $region11: #{tpu_custom_call.1} parent=5 // pred_region
        %s110 = ssub.s32 %s28, 1
      $region12: #{tpu_custom_call.1} parent=5 // pred_fallthru
        _
      %p111 = scmp.lt.s32.totalorder %s28, 4
      // Predicated region
      $region13: #{tpu_custom_call.1} parent=5 // pred_check
        %p112 = pneg %p111
      $region14: #{tpu_custom_call.1} parent=5 // pred_check_branch
        %114 = sbr.rel (%p112) target = $region16
      $region15: #{tpu_custom_call.1} parent=5 // pred_region
        // Predicated region
        $region17: #{tpu_custom_call.1} parent=15 // pred_check
          %p115 = pneg %p62
        $region18: #{tpu_custom_call.1} parent=15 // pred_check_branch
          %117 = sbr.rel (%p115) target = $region20
        $region19: #{tpu_custom_call.1} parent=15 // pred_region
          %s118 = sand.u32 %s52, 1
          %s119 = scalar_lea.sflag [#allocation6], %s118
          %s120 = sand.u32 %s52, 1
          %s121 = smul.addr %s120, 4
          %s122 = scalar_lea.vmem [#allocation5], %s121
          %s123 = smul.u32 2, %s36
          %125 = vsyncadd %s119, 0
          %s126 = smul.addr %s35, 2
          %s127 = smul.addr %s123, 8
          %s128 = sadd.s32 %s126, %s127
          %s129 = scalar_lea.hbm %s2, %s128
          %s130 = sshll.u32 %s129, 4
          %s131 = int_to_ptr.hbm [resolvable:$true] %s130
          %s132 = sshll.u32 %s122, 4
          %s133 = int_to_ptr.vmem [resolvable:$true] %s132
          %138 = dma.hbm_to_vmem [thread:$0]  %s131, 64, %s133, %s119, 128, 32, 2
        $region20: #{tpu_custom_call.1} parent=15 // pred_fallthru
          _
      $region16: #{tpu_custom_call.1} parent=5 // pred_fallthru
        _
      %p139 = scmp.le.s32.totalorder 1, %s28
      %p140 = scmp.lt.s32.totalorder %s28, 5
      %p141 = pnand %p139, %p140
      %p142 = pneg %p141
      // Predicated region
      $region21: #{tpu_custom_call.1} parent=5 // pred_check
        _
      $region22: #{tpu_custom_call.1} parent=5 // pred_check_branch
        %144 = sbr.rel (%p141) target = $region24
      $region23: #{tpu_custom_call.1} parent=5 // pred_region
        %s145 = ssub.s32 %s28, 1
        %s146 = sand.u32 %s55, 1
        %s147 = scalar_lea.sflag [#allocation6], %s146
        %s148 = sand.u32 %s55, 1
        %s149 = smul.addr %s148, 4
        %s150 = scalar_lea.vmem [#allocation5], %s149
        // Predicated region
        $region25: #{tpu_custom_call.1} parent=23 // pred_check
          %p151 = pneg %p68
        $region26: #{tpu_custom_call.1} parent=23 // pred_check_branch
          %153 = sbr.rel (%p151) target = $region28
        $region27: #{tpu_custom_call.1} parent=23 // pred_region
          %155 = dma.done %s147, 64
        $region28: #{tpu_custom_call.1} parent=23 // pred_fallthru
          _
        %s156 = sand.u32 %s55, 1
        %s157 = scalar_lea.sflag [#allocation6], %s156
        %s158 = sand.u32 %s55, 1
        %s159 = smul.addr %s158, 4
        %s160 = scalar_lea.vmem [#allocation5], %s159
        %p161 = pneg %p68
        %p162 = pneg %p65
        %p163 = pneg %p96
        %p164 = pneg %p93
        %s165 = sand.u32 %s83, 1
        %s166 = scalar_lea.sflag [#allocation7], %s165
        %s167 = sand.u32 %s83, 1
        %s168 = smul.addr %s167, 4
        %s169 = scalar_lea.vmem [#allocation8], %s168
        %s170 = smul.u32 2, %s38
        %s171 = smul.u32 2, %s38
        %s172 = sld [smem:[#allocation3 + %s37]]
        %s173 = sld [smem:[#allocation4 + %s37]]
        %v174 = vld [vmem:[%s150] sm:$0x3]
        %v175 = vld [vmem:[%s150 + $0x2] sm:$0x3]
        %v176 = vstv %s172
        %v177 = vmul.f32 %v174, %v176
        %v178 = vmul.f32 %v175, %v176
        %v179 = vstv %s173
        %v180 = vadd.f32 %v177, %v179
        %v181 = vadd.f32 %v178, %v179
        %v182 = vlaneseq
        %vm183 = vcmp.ge.s32.totalorder %v182, 0
        %vm184 = vcmp.lt.s32.totalorder %v182, 256
        %vm185 = vmand %vm183, %vm184
        %186 = vst.msk [vmem:[%s169] sm:$0x3] %vm185, %v180
        %187 = vst.msk [vmem:[%s169 + $0x2] sm:$0x3] %vm185, %v181
        %s188 = sand.u32 %s83, 1
        %s189 = scalar_lea.sflag [#allocation7], %s188
        %s190 = sand.u32 %s83, 1
        %s191 = smul.addr %s190, 4
        %s192 = scalar_lea.vmem [#allocation8], %s191
        // Predicated region
        $region29: #{tpu_custom_call.1} parent=23 // pred_check
          %p193 = pneg %p93
        $region30: #{tpu_custom_call.1} parent=23 // pred_check_branch
          %195 = sbr.rel (%p193) target = $region32
        $region31: #{tpu_custom_call.1} parent=23 // pred_region
          %s196 = smul.u32 2, %s38
          %198 = vsyncadd %s189, 0
          %s199 = smul.addr %s37, 2
          %s200 = smul.addr %s196, 8
          %s201 = sadd.s32 %s199, %s200
          %s202 = scalar_lea.hbm %s3, %s201
          %s203 = sshll.u32 %s192, 4
          %s204 = int_to_ptr.vmem [resolvable:$true] %s203
          %s205 = sshll.u32 %s202, 4
          %s206 = int_to_ptr.hbm [resolvable:$true] %s205
          %211 = dma.vmem_to_hbm [thread:$0]  %s204, 64, %s206, %s189, 32, 128, 2
        $region32: #{tpu_custom_call.1} parent=23 // pred_fallthru
          _
      $region24: #{tpu_custom_call.1} parent=5 // pred_fallthru
        _
      %p212 = scmp.le.s32.totalorder 2, %s28
      // Predicated region
      $region33: #{tpu_custom_call.1} parent=5 // pred_check
        %p213 = pneg %p212
      $region34: #{tpu_custom_call.1} parent=5 // pred_check_branch
        %215 = sbr.rel (%p213) target = $region36
      $region35: #{tpu_custom_call.1} parent=5 // pred_region
        %s216 = ssub.s32 %s28, 2
        // Predicated region
        $region37: #{tpu_custom_call.1} parent=35 // pred_check
          %p217 = pneg %p99
        $region38: #{tpu_custom_call.1} parent=35 // pred_check_branch
          %219 = sbr.rel (%p217) target = $region40
        $region39: #{tpu_custom_call.1} parent=35 // pred_region
          %s220 = sand.u32 %s84, 1
          %s221 = scalar_lea.sflag [#allocation7], %s220
          %s222 = sand.u32 %s84, 1
          %s223 = smul.addr %s222, 4
          %s224 = scalar_lea.vmem [#allocation8], %s223
          %226 = dma.done %s221, 64
        $region40: #{tpu_custom_call.1} parent=35 // pred_fallthru
          _
      $region36: #{tpu_custom_call.1} parent=5 // pred_fallthru
        _
    $region6: #{tpu_custom_call.1} parent=1 // loop_footer
      %s32 = sadd.s32 1, %s28
    $region7: #{tpu_custom_call.1} parent=1 // loop_footer_branch
      %27 = sbr.rel target = $region3
    $region8: #{tpu_custom_call.1} parent=1 // loop_exit
      _
    %227 = vsyncpa [#allocation6], 1
    %s228 = scalar_lea.sflag [#allocation6], 1
    %229 = vsyncpa %s228, 1
    %230 = vsyncpa [#allocation7], 1
    %s231 = scalar_lea.sflag [#allocation7], 1
    %232 = vsyncpa %s231, 1

</llo_original>
